<compile_context>
chip_gen: v5e
topology: v5e:2x2
jax: 0.10.0
libtpu: 0.0.40
codegen_flags: <defaults>
</compile_context>

<pallas_src>
import jax
import jax.numpy as jnp
from jax.experimental import pallas as pl
from jax.experimental.pallas import tpu as pltpu

BN_EPS = 1e-5
VMEM_BUDGET_BYTES = 20 * 1024 * 1024   # conservative: fits v7x's 32 MiB scoped default
VMEM_LIMIT_BYTES = 32 * 1024 * 1024


# ------------------------------ Pallas kernel ------------------------------ #

def transition_kernel(x_ref, scale_ref, bias_ref, w_ref, o_ref):
    # x_ref     : (B, C*Ho, 2*W) VMEM  -- row q = c*Ho + ho holds input rows
    #             h = 2*ho (lanes [0:W]) and h = 2*ho+1 (lanes [W:2W]) of chan c
    # scale_ref : (C*Ho, 1)  VMEM      -- folded BN scale * 0.25 (repeated over Ho)
    # bias_ref  : (C*Ho, 1)  VMEM      -- folded BN bias  * 0.25 (repeated over Ho)
    # w_ref     : (Cout, C)  SMEM      -- 1x1 conv weight (scalar reads)
    # o_ref     : (B, Cout*Ho, Wo) VMEM
    B, CHo, W2 = x_ref.shape
    W = W2 // 2
    Wo = W // 2
    Cout, C = w_ref.shape
    Ho = CHo // C

    # BN (inference) + ReLU.  The 2x2-average 1/4 is pre-folded into
    # scale/bias, so the pool below is a plain sum of the four taps.
    y = jnp.maximum(x_ref[...] * scale_ref[...] + bias_ref[...], 0.0)  # (B,CHo,2W)

    # Row pair of every 2x2 window = the two contiguous lane halves.
    rows = y[:, :, 0:W] + y[:, :, W:2 * W]                             # (B,CHo,W)

    # Column pairs -> output lane wo via one-hot outer-product FMAs
    # (lane de-interleave without strided/gather ops; XLU/VPU have slack here).
    lane_idx = jax.lax.broadcasted_iota(jnp.int32, (1, Wo), 1)         # hoisted
    p = jnp.zeros((B, CHo, Wo), dtype=jnp.float32)
    for wo in range(Wo):
        col = (rows[:, :, 2 * wo:2 * wo + 1] +
               rows[:, :, 2 * wo + 1:2 * wo + 2])                      # (B,CHo,1)
        p = p + col * (lane_idx == wo).astype(jnp.float32)             # (B,CHo,Wo)

    # 1x1 conv = per-channel scalar FMAs on the VPU (exact f32 math).
    for co in range(Cout):
        acc = w_ref[co, 0] * p[:, 0:Ho, :]
        for c in range(1, C):
            acc = acc + w_ref[co, c] * p[:, c * Ho:(c + 1) * Ho, :]
        o_ref[:, co * Ho:(co + 1) * Ho, :] = acc                       # (B,Ho,Wo)


# --------------------------------- wrapper ---------------------------------- #

def transition_forward(x_nchw, gamma, beta, running_mean, running_var, conv_w):
    """Pallas implementation of Transition.forward (BN in inference mode).

    x_nchw : (N, C, H, W) float32
    gamma, beta, running_mean, running_var : (C,) float32
    conv_w : (Cout, C, 1, 1) float32  (PyTorch Conv2d weight layout)
    returns (N, Cout, H//2, W//2) float32
    """
    N, C, H, W = x_nchw.shape
    Cout = conv_w.shape[0]
    assert H % 2 == 0 and W % 2 == 0, "avg_pool2d(2) needs even spatial dims"
    Ho, Wo = H // 2, W // 2

    # Fold BN running stats and the 2x2-average 1/4 into per-row scale & bias
    # (row q = c*Ho + ho of the reshaped input).  Tiny wrapper-side arrays.
    scale_c = gamma * jax.lax.rsqrt(running_var + BN_EPS)
    bias_c = beta - running_mean * scale_c
    scale_rows = jnp.repeat(scale_c * 0.25, Ho).reshape(C * Ho, 1)
    bias_rows = jnp.repeat(bias_c * 0.25, Ho).reshape(C * Ho, 1)
    w_mat = conv_w.reshape(Cout, C)

    # Free (contiguous) reshape: (N, C, H, W) -> (N, C*Ho, 2*W).
    xr = x_nchw.reshape(N, C * Ho, 2 * W)

    # Images per grid step: largest batch block that fits the VMEM budget
    # (double-buffered input + output), preferring >=4 steps when the batch
    # allows it so multi-TensorCore chips (v7x) can shard and still pipeline.
    per_image_bytes = (C * H * W + Cout * Ho * Wo) * 4
    divisors = [d for d in range(1, N + 1) if N % d == 0]
    fitting = [d for d in divisors
               if 2 * d * per_image_bytes <= VMEM_BUDGET_BYTES] or [1]
    pipelined = [d for d in fitting if N // d >= 4]
    B = max(pipelined) if pipelined else max(fitting)

    out = pl.pallas_call(
        transition_kernel,
        out_shape=jax.ShapeDtypeStruct((N, Cout * Ho, Wo), jnp.float32),
        grid=(N // B,),
        in_specs=[
            pl.BlockSpec((B, C * Ho, 2 * W), lambda n: (n, 0, 0)),
            pl.BlockSpec((C * Ho, 1), lambda n: (0, 0)),
            pl.BlockSpec((C * Ho, 1), lambda n: (0, 0)),
            pl.BlockSpec(memory_space=pltpu.MemorySpace.SMEM),
        ],
        out_specs=pl.BlockSpec((B, Cout * Ho, Wo), lambda n: (n, 0, 0)),
        compiler_params=pltpu.CompilerParams(
            dimension_semantics=("parallel",),
            vmem_limit_bytes=VMEM_LIMIT_BYTES),
    )(xr, scale_rows, bias_rows, w_mat)

    # Free reshape back to NCHW.
    return out.reshape(N, Cout, Ho, Wo)


# ----------------------------- pure-JAX reference --------------------------- #

def ref_forward(x, gamma, beta, mean, var, conv_w):
    xh = (x - mean[None, :, None, None]) * jax.lax.rsqrt(
        var[None, :, None, None] + BN_EPS)
    xh = xh * gamma[None, :, None, None] + beta[None, :, None, None]
    xh = jnp.maximum(xh, 0.0)
    w = conv_w.reshape(conv_w.shape[0], conv_w.shape[1])
    # exact (non-MXU) 1x1 conv so the check does not depend on XLA matmul
    # precision defaults
    y = jnp.sum(xh[:, None, :, :, :] * w[None, :, :, None, None], axis=2)
    N, O, H, W = y.shape
    return y.reshape(N, O, H // 2, 2, W // 2, 2).mean(axis=(3, 5))


# ----------------------------------- main ----------------------------------- #

if __name__ == "__main__":
    nChannels, nOutChannels = 4, 8
    N, H, W = 2, 16, 16

    key = jax.random.PRNGKey(0)
    kx, kg, kb, km, kv, kw = jax.random.split(key, 6)

    x = jax.random.normal(kx, (N, nChannels, H, W), dtype=jnp.float32)
    gamma = jax.random.normal(kg, (nChannels,), dtype=jnp.float32)
    beta = jax.random.normal(kb, (nChannels,), dtype=jnp.float32)
    running_mean = jax.random.normal(km, (nChannels,), dtype=jnp.float32)
    running_var = jnp.abs(jax.random.normal(kv, (nChannels,), dtype=jnp.float32)) + 0.5
    conv_w = jax.random.normal(
        kw, (nOutChannels, nChannels, 1, 1), dtype=jnp.float32) * 0.1
    # NOTE: BN is implemented in inference mode (running stats), the standard
    # deployment semantics of nn.BatchNorm2d.
    # TODO(synk): training-mode BN (batch statistics + running-stat update) is
    # not implemented.

    out = transition_forward(x, gamma, beta, running_mean, running_var, conv_w)
    out = jax.block_until_ready(out)

    expected = ref_forward(x, gamma, beta, running_mean, running_var, conv_w)
    assert out.shape == (N, nOutChannels, H // 2, W // 2), out.shape
    max_err = float(jnp.max(jnp.abs(out - expected)))
    assert jnp.allclose(out, expected, atol=1e-4, rtol=1e-4), max_err

    print("KERNEL_OK")
</pallas_src>

<mosaic_0001>
module attributes {stable_mosaic.version = 11 : i64} {
  func.func @transition_kernel(%arg0: i32, %arg1: memref<2x32x32xf32, #tpu.memory_space<vmem>>, %arg2: memref<32x1xf32, #tpu.memory_space<vmem>>, %arg3: memref<32x1xf32, #tpu.memory_space<vmem>>, %arg4: memref<8x4xf32, #tpu.memory_space<smem>>, %arg5: memref<2x64x8xf32, #tpu.memory_space<vmem>>) attributes {dimension_semantics = [#tpu.dimension_semantics<parallel>], iteration_bounds = array<i64: 1>, scalar_prefetch = 0 : i64, scratch_operands = 0 : i64, tpu.core_type = #tpu.core_type<tc>, window_params = [{transform_indices = @transform_0, window_bounds = array<i64: 2, 32, 32>}, {pipeline_mode = #tpu.pipeline_mode<synchronous>, transform_indices = @transform_1, window_bounds = array<i64: 32, 1>}, {pipeline_mode = #tpu.pipeline_mode<synchronous>, transform_indices = @transform_2, window_bounds = array<i64: 32, 1>}, {transform_indices = @transform_3, window_bounds = array<i64: 8, 4>}, {transform_indices = @transform_4, window_bounds = array<i64: 2, 64, 8>}]} {
    %c0 = arith.constant 0 : index
    %c0_0 = arith.constant 0 : index
    %c0_1 = arith.constant 0 : index
    %0 = vector.load %arg1[%c0, %c0_0, %c0_1] : memref<2x32x32xf32, #tpu.memory_space<vmem>>, vector<2x32x32xf32>
    %c0_2 = arith.constant 0 : index
    %c0_3 = arith.constant 0 : index
    %1 = vector.load %arg2[%c0_2, %c0_3] : memref<32x1xf32, #tpu.memory_space<vmem>>, vector<32x1xf32>
    %2 = vector.shape_cast %1 : vector<32x1xf32> to vector<1x32x1xf32>
    %3 = vector.broadcast %2 : vector<1x32x1xf32> to vector<2x32x32xf32>
    %4 = arith.mulf %0, %3 : vector<2x32x32xf32>
    %c0_4 = arith.constant 0 : index
    %c0_5 = arith.constant 0 : index
    %5 = vector.load %arg3[%c0_4, %c0_5] : memref<32x1xf32, #tpu.memory_space<vmem>>, vector<32x1xf32>
    %6 = vector.shape_cast %5 : vector<32x1xf32> to vector<1x32x1xf32>
    %7 = vector.broadcast %6 : vector<1x32x1xf32> to vector<2x32x32xf32>
    %8 = arith.addf %4, %7 : vector<2x32x32xf32>
    %cst = arith.constant 0.000000e+00 : f32
    %9 = vector.broadcast %cst : f32 to vector<2x32x32xf32>
    %10 = arith.maximumf %8, %9 : vector<2x32x32xf32>
    %11 = vector.extract_strided_slice %10 {offsets = [0, 0, 0], sizes = [2, 32, 16], strides = [1, 1, 1]} : vector<2x32x32xf32> to vector<2x32x16xf32>
    %12 = vector.extract_strided_slice %10 {offsets = [0, 0, 16], sizes = [2, 32, 16], strides = [1, 1, 1]} : vector<2x32x32xf32> to vector<2x32x16xf32>
    %13 = arith.addf %11, %12 : vector<2x32x16xf32>
    %14 = tpu.iota {dimensions = array<i32: 1>} : vector<1x8xi32>
    %cst_6 = arith.constant 0.000000e+00 : f32
    %15 = vector.broadcast %cst_6 : f32 to vector<2x32x8xf32>
    %16 = vector.extract_strided_slice %13 {offsets = [0, 0, 0], sizes = [2, 32, 1], strides = [1, 1, 1]} : vector<2x32x16xf32> to vector<2x32x1xf32>
    %17 = vector.extract_strided_slice %13 {offsets = [0, 0, 1], sizes = [2, 32, 1], strides = [1, 1, 1]} : vector<2x32x16xf32> to vector<2x32x1xf32>
    %18 = arith.addf %16, %17 : vector<2x32x1xf32>
    %c0_i32 = arith.constant 0 : i32
    %19 = vector.broadcast %c0_i32 : i32 to vector<1x8xi32>
    %20 = arith.cmpi eq, %14, %19 : vector<1x8xi32>
    %21 = arith.extui %20 : vector<1x8xi1> to vector<1x8xi32>
    %22 = arith.sitofp %21 : vector<1x8xi32> to vector<1x8xf32>
    %23 = vector.shape_cast %22 : vector<1x8xf32> to vector<1x1x8xf32>
    %24 = vector.broadcast %18 : vector<2x32x1xf32> to vector<2x32x8xf32>
    %25 = vector.broadcast %23 : vector<1x1x8xf32> to vector<2x32x8xf32>
    %26 = arith.mulf %24, %25 : vector<2x32x8xf32>
    %27 = arith.addf %15, %26 : vector<2x32x8xf32>
    %28 = vector.extract_strided_slice %13 {offsets = [0, 0, 2], sizes = [2, 32, 1], strides = [1, 1, 1]} : vector<2x32x16xf32> to vector<2x32x1xf32>
    %29 = vector.extract_strided_slice %13 {offsets = [0, 0, 3], sizes = [2, 32, 1], strides = [1, 1, 1]} : vector<2x32x16xf32> to vector<2x32x1xf32>
    %30 = arith.addf %28, %29 : vector<2x32x1xf32>
    %c1_i32 = arith.constant 1 : i32
    %31 = vector.broadcast %c1_i32 : i32 to vector<1x8xi32>
    %32 = arith.cmpi eq, %14, %31 : vector<1x8xi32>
    %33 = arith.extui %32 : vector<1x8xi1> to vector<1x8xi32>
    %34 = arith.sitofp %33 : vector<1x8xi32> to vector<1x8xf32>
    %35 = vector.shape_cast %34 : vector<1x8xf32> to vector<1x1x8xf32>
    %36 = vector.broadcast %30 : vector<2x32x1xf32> to vector<2x32x8xf32>
    %37 = vector.broadcast %35 : vector<1x1x8xf32> to vector<2x32x8xf32>
    %38 = arith.mulf %36, %37 : vector<2x32x8xf32>
    %39 = arith.addf %27, %38 : vector<2x32x8xf32>
    %40 = vector.extract_strided_slice %13 {offsets = [0, 0, 4], sizes = [2, 32, 1], strides = [1, 1, 1]} : vector<2x32x16xf32> to vector<2x32x1xf32>
    %41 = vector.extract_strided_slice %13 {offsets = [0, 0, 5], sizes = [2, 32, 1], strides = [1, 1, 1]} : vector<2x32x16xf32> to vector<2x32x1xf32>
    %42 = arith.addf %40, %41 : vector<2x32x1xf32>
    %c2_i32 = arith.constant 2 : i32
    %43 = vector.broadcast %c2_i32 : i32 to vector<1x8xi32>
    %44 = arith.cmpi eq, %14, %43 : vector<1x8xi32>
    %45 = arith.extui %44 : vector<1x8xi1> to vector<1x8xi32>
    %46 = arith.sitofp %45 : vector<1x8xi32> to vector<1x8xf32>
    %47 = vector.shape_cast %46 : vector<1x8xf32> to vector<1x1x8xf32>
    %48 = vector.broadcast %42 : vector<2x32x1xf32> to vector<2x32x8xf32>
    %49 = vector.broadcast %47 : vector<1x1x8xf32> to vector<2x32x8xf32>
    %50 = arith.mulf %48, %49 : vector<2x32x8xf32>
    %51 = arith.addf %39, %50 : vector<2x32x8xf32>
    %52 = vector.extract_strided_slice %13 {offsets = [0, 0, 6], sizes = [2, 32, 1], strides = [1, 1, 1]} : vector<2x32x16xf32> to vector<2x32x1xf32>
    %53 = vector.extract_strided_slice %13 {offsets = [0, 0, 7], sizes = [2, 32, 1], strides = [1, 1, 1]} : vector<2x32x16xf32> to vector<2x32x1xf32>
    %54 = arith.addf %52, %53 : vector<2x32x1xf32>
    %c3_i32 = arith.constant 3 : i32
    %55 = vector.broadcast %c3_i32 : i32 to vector<1x8xi32>
    %56 = arith.cmpi eq, %14, %55 : vector<1x8xi32>
    %57 = arith.extui %56 : vector<1x8xi1> to vector<1x8xi32>
    %58 = arith.sitofp %57 : vector<1x8xi32> to vector<1x8xf32>
    %59 = vector.shape_cast %58 : vector<1x8xf32> to vector<1x1x8xf32>
    %60 = vector.broadcast %54 : vector<2x32x1xf32> to vector<2x32x8xf32>
    %61 = vector.broadcast %59 : vector<1x1x8xf32> to vector<2x32x8xf32>
    %62 = arith.mulf %60, %61 : vector<2x32x8xf32>
    %63 = arith.addf %51, %62 : vector<2x32x8xf32>
    %64 = vector.extract_strided_slice %13 {offsets = [0, 0, 8], sizes = [2, 32, 1], strides = [1, 1, 1]} : vector<2x32x16xf32> to vector<2x32x1xf32>
    %65 = vector.extract_strided_slice %13 {offsets = [0, 0, 9], sizes = [2, 32, 1], strides = [1, 1, 1]} : vector<2x32x16xf32> to vector<2x32x1xf32>
    %66 = arith.addf %64, %65 : vector<2x32x1xf32>
    %c4_i32 = arith.constant 4 : i32
    %67 = vector.broadcast %c4_i32 : i32 to vector<1x8xi32>
    %68 = arith.cmpi eq, %14, %67 : vector<1x8xi32>
    %69 = arith.extui %68 : vector<1x8xi1> to vector<1x8xi32>
    %70 = arith.sitofp %69 : vector<1x8xi32> to vector<1x8xf32>
    %71 = vector.shape_cast %70 : vector<1x8xf32> to vector<1x1x8xf32>
    %72 = vector.broadcast %66 : vector<2x32x1xf32> to vector<2x32x8xf32>
    %73 = vector.broadcast %71 : vector<1x1x8xf32> to vector<2x32x8xf32>
    %74 = arith.mulf %72, %73 : vector<2x32x8xf32>
    %75 = arith.addf %63, %74 : vector<2x32x8xf32>
    %76 = vector.extract_strided_slice %13 {offsets = [0, 0, 10], sizes = [2, 32, 1], strides = [1, 1, 1]} : vector<2x32x16xf32> to vector<2x32x1xf32>
    %77 = vector.extract_strided_slice %13 {offsets = [0, 0, 11], sizes = [2, 32, 1], strides = [1, 1, 1]} : vector<2x32x16xf32> to vector<2x32x1xf32>
    %78 = arith.addf %76, %77 : vector<2x32x1xf32>
    %c5_i32 = arith.constant 5 : i32
    %79 = vector.broadcast %c5_i32 : i32 to vector<1x8xi32>
    %80 = arith.cmpi eq, %14, %79 : vector<1x8xi32>
    %81 = arith.extui %80 : vector<1x8xi1> to vector<1x8xi32>
    %82 = arith.sitofp %81 : vector<1x8xi32> to vector<1x8xf32>
    %83 = vector.shape_cast %82 : vector<1x8xf32> to vector<1x1x8xf32>
    %84 = vector.broadcast %78 : vector<2x32x1xf32> to vector<2x32x8xf32>
    %85 = vector.broadcast %83 : vector<1x1x8xf32> to vector<2x32x8xf32>
    %86 = arith.mulf %84, %85 : vector<2x32x8xf32>
    %87 = arith.addf %75, %86 : vector<2x32x8xf32>
    %88 = vector.extract_strided_slice %13 {offsets = [0, 0, 12], sizes = [2, 32, 1], strides = [1, 1, 1]} : vector<2x32x16xf32> to vector<2x32x1xf32>
    %89 = vector.extract_strided_slice %13 {offsets = [0, 0, 13], sizes = [2, 32, 1], strides = [1, 1, 1]} : vector<2x32x16xf32> to vector<2x32x1xf32>
    %90 = arith.addf %88, %89 : vector<2x32x1xf32>
    %c6_i32 = arith.constant 6 : i32
    %91 = vector.broadcast %c6_i32 : i32 to vector<1x8xi32>
    %92 = arith.cmpi eq, %14, %91 : vector<1x8xi32>
    %93 = arith.extui %92 : vector<1x8xi1> to vector<1x8xi32>
    %94 = arith.sitofp %93 : vector<1x8xi32> to vector<1x8xf32>
    %95 = vector.shape_cast %94 : vector<1x8xf32> to vector<1x1x8xf32>
    %96 = vector.broadcast %90 : vector<2x32x1xf32> to vector<2x32x8xf32>
    %97 = vector.broadcast %95 : vector<1x1x8xf32> to vector<2x32x8xf32>
    %98 = arith.mulf %96, %97 : vector<2x32x8xf32>
    %99 = arith.addf %87, %98 : vector<2x32x8xf32>
    %100 = vector.extract_strided_slice %13 {offsets = [0, 0, 14], sizes = [2, 32, 1], strides = [1, 1, 1]} : vector<2x32x16xf32> to vector<2x32x1xf32>
    %101 = vector.extract_strided_slice %13 {offsets = [0, 0, 15], sizes = [2, 32, 1], strides = [1, 1, 1]} : vector<2x32x16xf32> to vector<2x32x1xf32>
    %102 = arith.addf %100, %101 : vector<2x32x1xf32>
    %c7_i32 = arith.constant 7 : i32
    %103 = vector.broadcast %c7_i32 : i32 to vector<1x8xi32>
    %104 = arith.cmpi eq, %14, %103 : vector<1x8xi32>
    %105 = arith.extui %104 : vector<1x8xi1> to vector<1x8xi32>
    %106 = arith.sitofp %105 : vector<1x8xi32> to vector<1x8xf32>
    %107 = vector.shape_cast %106 : vector<1x8xf32> to vector<1x1x8xf32>
    %108 = vector.broadcast %102 : vector<2x32x1xf32> to vector<2x32x8xf32>
    %109 = vector.broadcast %107 : vector<1x1x8xf32> to vector<2x32x8xf32>
    %110 = arith.mulf %108, %109 : vector<2x32x8xf32>
    %111 = arith.addf %99, %110 : vector<2x32x8xf32>
    %c0_7 = arith.constant 0 : index
    %c0_8 = arith.constant 0 : index
    %112 = memref.load %arg4[%c0_7, %c0_8] : memref<8x4xf32, #tpu.memory_space<smem>>
    %113 = vector.extract_strided_slice %111 {offsets = [0, 0, 0], sizes = [2, 8, 8], strides = [1, 1, 1]} : vector<2x32x8xf32> to vector<2x8x8xf32>
    %114 = vector.broadcast %112 : f32 to vector<2x8x8xf32>
    %115 = arith.mulf %114, %113 : vector<2x8x8xf32>
    %c0_9 = arith.constant 0 : index
    %c1 = arith.constant 1 : index
    %116 = memref.load %arg4[%c0_9, %c1] : memref<8x4xf32, #tpu.memory_space<smem>>
    %117 = vector.extract_strided_slice %111 {offsets = [0, 8, 0], sizes = [2, 8, 8], strides = [1, 1, 1]} : vector<2x32x8xf32> to vector<2x8x8xf32>
    %118 = vector.broadcast %116 : f32 to vector<2x8x8xf32>
    %119 = arith.mulf %118, %117 : vector<2x8x8xf32>
    %120 = arith.addf %115, %119 : vector<2x8x8xf32>
    %c0_10 = arith.constant 0 : index
    %c2 = arith.constant 2 : index
    %121 = memref.load %arg4[%c0_10, %c2] : memref<8x4xf32, #tpu.memory_space<smem>>
    %122 = vector.extract_strided_slice %111 {offsets = [0, 16, 0], sizes = [2, 8, 8], strides = [1, 1, 1]} : vector<2x32x8xf32> to vector<2x8x8xf32>
    %123 = vector.broadcast %121 : f32 to vector<2x8x8xf32>
    %124 = arith.mulf %123, %122 : vector<2x8x8xf32>
    %125 = arith.addf %120, %124 : vector<2x8x8xf32>
    %c0_11 = arith.constant 0 : index
    %c3 = arith.constant 3 : index
    %126 = memref.load %arg4[%c0_11, %c3] : memref<8x4xf32, #tpu.memory_space<smem>>
    %127 = vector.extract_strided_slice %111 {offsets = [0, 24, 0], sizes = [2, 8, 8], strides = [1, 1, 1]} : vector<2x32x8xf32> to vector<2x8x8xf32>
    %128 = vector.broadcast %126 : f32 to vector<2x8x8xf32>
    %129 = arith.mulf %128, %127 : vector<2x8x8xf32>
    %130 = arith.addf %125, %129 : vector<2x8x8xf32>
    %c0_12 = arith.constant 0 : index
    %c0_13 = arith.constant 0 : index
    %c0_14 = arith.constant 0 : index
    %131 = vector.load %arg5[%c0_12, %c0_13, %c0_14] : memref<2x64x8xf32, #tpu.memory_space<vmem>>, vector<2x8x8xf32>
    tpu.vector_store %arg5[%c0_12, %c0_13, %c0_14], %130 {strides = array<i32>} : memref<2x64x8xf32, #tpu.memory_space<vmem>>, vector<2x8x8xf32>,
    %c1_15 = arith.constant 1 : index
    %c0_16 = arith.constant 0 : index
    %132 = memref.load %arg4[%c1_15, %c0_16] : memref<8x4xf32, #tpu.memory_space<smem>>
    %133 = vector.extract_strided_slice %111 {offsets = [0, 0, 0], sizes = [2, 8, 8], strides = [1, 1, 1]} : vector<2x32x8xf32> to vector<2x8x8xf32>
    %134 = vector.broadcast %132 : f32 to vector<2x8x8xf32>
    %135 = arith.mulf %134, %133 : vector<2x8x8xf32>
    %c1_17 = arith.constant 1 : index
    %c1_18 = arith.constant 1 : index
    %136 = memref.load %arg4[%c1_17, %c1_18] : memref<8x4xf32, #tpu.memory_space<smem>>
    %137 = vector.extract_strided_slice %111 {offsets = [0, 8, 0], sizes = [2, 8, 8], strides = [1, 1, 1]} : vector<2x32x8xf32> to vector<2x8x8xf32>
    %138 = vector.broadcast %136 : f32 to vector<2x8x8xf32>
    %139 = arith.mulf %138, %137 : vector<2x8x8xf32>
    %140 = arith.addf %135, %139 : vector<2x8x8xf32>
    %c1_19 = arith.constant 1 : index
    %c2_20 = arith.constant 2 : index
    %141 = memref.load %arg4[%c1_19, %c2_20] : memref<8x4xf32, #tpu.memory_space<smem>>
    %142 = vector.extract_strided_slice %111 {offsets = [0, 16, 0], sizes = [2, 8, 8], strides = [1, 1, 1]} : vector<2x32x8xf32> to vector<2x8x8xf32>
    %143 = vector.broadcast %141 : f32 to vector<2x8x8xf32>
    %144 = arith.mulf %143, %142 : vector<2x8x8xf32>
    %145 = arith.addf %140, %144 : vector<2x8x8xf32>
    %c1_21 = arith.constant 1 : index
    %c3_22 = arith.constant 3 : index
    %146 = memref.load %arg4[%c1_21, %c3_22] : memref<8x4xf32, #tpu.memory_space<smem>>
    %147 = vector.extract_strided_slice %111 {offsets = [0, 24, 0], sizes = [2, 8, 8], strides = [1, 1, 1]} : vector<2x32x8xf32> to vector<2x8x8xf32>
    %148 = vector.broadcast %146 : f32 to vector<2x8x8xf32>
    %149 = arith.mulf %148, %147 : vector<2x8x8xf32>
    %150 = arith.addf %145, %149 : vector<2x8x8xf32>
    %c0_23 = arith.constant 0 : index
    %c8 = arith.constant 8 : index
    %c0_24 = arith.constant 0 : index
    %151 = vector.load %arg5[%c0_23, %c8, %c0_24] : memref<2x64x8xf32, #tpu.memory_space<vmem>>, vector<2x8x8xf32>
    tpu.vector_store %arg5[%c0_23, %c8, %c0_24], %150 {strides = array<i32>} : memref<2x64x8xf32, #tpu.memory_space<vmem>>, vector<2x8x8xf32>,
    %c2_25 = arith.constant 2 : index
    %c0_26 = arith.constant 0 : index
    %152 = memref.load %arg4[%c2_25, %c0_26] : memref<8x4xf32, #tpu.memory_space<smem>>
    %153 = vector.extract_strided_slice %111 {offsets = [0, 0, 0], sizes = [2, 8, 8], strides = [1, 1, 1]} : vector<2x32x8xf32> to vector<2x8x8xf32>
    %154 = vector.broadcast %152 : f32 to vector<2x8x8xf32>
    %155 = arith.mulf %154, %153 : vector<2x8x8xf32>
    %c2_27 = arith.constant 2 : index
    %c1_28 = arith.constant 1 : index
    %156 = memref.load %arg4[%c2_27, %c1_28] : memref<8x4xf32, #tpu.memory_space<smem>>
    %157 = vector.extract_strided_slice %111 {offsets = [0, 8, 0], sizes = [2, 8, 8], strides = [1, 1, 1]} : vector<2x32x8xf32> to vector<2x8x8xf32>
    %158 = vector.broadcast %156 : f32 to vector<2x8x8xf32>
    %159 = arith.mulf %158, %157 : vector<2x8x8xf32>
    %160 = arith.addf %155, %159 : vector<2x8x8xf32>
    %c2_29 = arith.constant 2 : index
    %c2_30 = arith.constant 2 : index
    %161 = memref.load %arg4[%c2_29, %c2_30] : memref<8x4xf32, #tpu.memory_space<smem>>
    %162 = vector.extract_strided_slice %111 {offsets = [0, 16, 0], sizes = [2, 8, 8], strides = [1, 1, 1]} : vector<2x32x8xf32> to vector<2x8x8xf32>
    %163 = vector.broadcast %161 : f32 to vector<2x8x8xf32>
    %164 = arith.mulf %163, %162 : vector<2x8x8xf32>
    %165 = arith.addf %160, %164 : vector<2x8x8xf32>
    %c2_31 = arith.constant 2 : index
    %c3_32 = arith.constant 3 : index
    %166 = memref.load %arg4[%c2_31, %c3_32] : memref<8x4xf32, #tpu.memory_space<smem>>
    %167 = vector.extract_strided_slice %111 {offsets = [0, 24, 0], sizes = [2, 8, 8], strides = [1, 1, 1]} : vector<2x32x8xf32> to vector<2x8x8xf32>
    %168 = vector.broadcast %166 : f32 to vector<2x8x8xf32>
    %169 = arith.mulf %168, %167 : vector<2x8x8xf32>
    %170 = arith.addf %165, %169 : vector<2x8x8xf32>
    %c0_33 = arith.constant 0 : index
    %c16 = arith.constant 16 : index
    %c0_34 = arith.constant 0 : index
    %171 = vector.load %arg5[%c0_33, %c16, %c0_34] : memref<2x64x8xf32, #tpu.memory_space<vmem>>, vector<2x8x8xf32>
    tpu.vector_store %arg5[%c0_33, %c16, %c0_34], %170 {strides = array<i32>} : memref<2x64x8xf32, #tpu.memory_space<vmem>>, vector<2x8x8xf32>,
    %c3_35 = arith.constant 3 : index
    %c0_36 = arith.constant 0 : index
    %172 = memref.load %arg4[%c3_35, %c0_36] : memref<8x4xf32, #tpu.memory_space<smem>>
    %173 = vector.extract_strided_slice %111 {offsets = [0, 0, 0], sizes = [2, 8, 8], strides = [1, 1, 1]} : vector<2x32x8xf32> to vector<2x8x8xf32>
    %174 = vector.broadcast %172 : f32 to vector<2x8x8xf32>
    %175 = arith.mulf %174, %173 : vector<2x8x8xf32>
    %c3_37 = arith.constant 3 : index
    %c1_38 = arith.constant 1 : index
    %176 = memref.load %arg4[%c3_37, %c1_38] : memref<8x4xf32, #tpu.memory_space<smem>>
    %177 = vector.extract_strided_slice %111 {offsets = [0, 8, 0], sizes = [2, 8, 8], strides = [1, 1, 1]} : vector<2x32x8xf32> to vector<2x8x8xf32>
    %178 = vector.broadcast %176 : f32 to vector<2x8x8xf32>
    %179 = arith.mulf %178, %177 : vector<2x8x8xf32>
    %180 = arith.addf %175, %179 : vector<2x8x8xf32>
    %c3_39 = arith.constant 3 : index
    %c2_40 = arith.constant 2 : index
    %181 = memref.load %arg4[%c3_39, %c2_40] : memref<8x4xf32, #tpu.memory_space<smem>>
    %182 = vector.extract_strided_slice %111 {offsets = [0, 16, 0], sizes = [2, 8, 8], strides = [1, 1, 1]} : vector<2x32x8xf32> to vector<2x8x8xf32>
    %183 = vector.broadcast %181 : f32 to vector<2x8x8xf32>
    %184 = arith.mulf %183, %182 : vector<2x8x8xf32>
    %185 = arith.addf %180, %184 : vector<2x8x8xf32>
    %c3_41 = arith.constant 3 : index
    %c3_42 = arith.constant 3 : index
    %186 = memref.load %arg4[%c3_41, %c3_42] : memref<8x4xf32, #tpu.memory_space<smem>>
    %187 = vector.extract_strided_slice %111 {offsets = [0, 24, 0], sizes = [2, 8, 8], strides = [1, 1, 1]} : vector<2x32x8xf32> to vector<2x8x8xf32>
    %188 = vector.broadcast %186 : f32 to vector<2x8x8xf32>
    %189 = arith.mulf %188, %187 : vector<2x8x8xf32>
    %190 = arith.addf %185, %189 : vector<2x8x8xf32>
    %c0_43 = arith.constant 0 : index
    %c24 = arith.constant 24 : index
    %c0_44 = arith.constant 0 : index
    %191 = vector.load %arg5[%c0_43, %c24, %c0_44] : memref<2x64x8xf32, #tpu.memory_space<vmem>>, vector<2x8x8xf32>
    tpu.vector_store %arg5[%c0_43, %c24, %c0_44], %190 {strides = array<i32>} : memref<2x64x8xf32, #tpu.memory_space<vmem>>, vector<2x8x8xf32>,
    %c4 = arith.constant 4 : index
    %c0_45 = arith.constant 0 : index
    %192 = memref.load %arg4[%c4, %c0_45] : memref<8x4xf32, #tpu.memory_space<smem>>
    %193 = vector.extract_strided_slice %111 {offsets = [0, 0, 0], sizes = [2, 8, 8], strides = [1, 1, 1]} : vector<2x32x8xf32> to vector<2x8x8xf32>
    %194 = vector.broadcast %192 : f32 to vector<2x8x8xf32>
    %195 = arith.mulf %194, %193 : vector<2x8x8xf32>
    %c4_46 = arith.constant 4 : index
    %c1_47 = arith.constant 1 : index
    %196 = memref.load %arg4[%c4_46, %c1_47] : memref<8x4xf32, #tpu.memory_space<smem>>
    %197 = vector.extract_strided_slice %111 {offsets = [0, 8, 0], sizes = [2, 8, 8], strides = [1, 1, 1]} : vector<2x32x8xf32> to vector<2x8x8xf32>
    %198 = vector.broadcast %196 : f32 to vector<2x8x8xf32>
    %199 = arith.mulf %198, %197 : vector<2x8x8xf32>
    %200 = arith.addf %195, %199 : vector<2x8x8xf32>
    %c4_48 = arith.constant 4 : index
    %c2_49 = arith.constant 2 : index
    %201 = memref.load %arg4[%c4_48, %c2_49] : memref<8x4xf32, #tpu.memory_space<smem>>
    %202 = vector.extract_strided_slice %111 {offsets = [0, 16, 0], sizes = [2, 8, 8], strides = [1, 1, 1]} : vector<2x32x8xf32> to vector<2x8x8xf32>
    %203 = vector.broadcast %201 : f32 to vector<2x8x8xf32>
    %204 = arith.mulf %203, %202 : vector<2x8x8xf32>
    %205 = arith.addf %200, %204 : vector<2x8x8xf32>
    %c4_50 = arith.constant 4 : index
    %c3_51 = arith.constant 3 : index
    %206 = memref.load %arg4[%c4_50, %c3_51] : memref<8x4xf32, #tpu.memory_space<smem>>
    %207 = vector.extract_strided_slice %111 {offsets = [0, 24, 0], sizes = [2, 8, 8], strides = [1, 1, 1]} : vector<2x32x8xf32> to vector<2x8x8xf32>
    %208 = vector.broadcast %206 : f32 to vector<2x8x8xf32>
    %209 = arith.mulf %208, %207 : vector<2x8x8xf32>
    %210 = arith.addf %205, %209 : vector<2x8x8xf32>
    %c0_52 = arith.constant 0 : index
    %c32 = arith.constant 32 : index
    %c0_53 = arith.constant 0 : index
    %211 = vector.load %arg5[%c0_52, %c32, %c0_53] : memref<2x64x8xf32, #tpu.memory_space<vmem>>, vector<2x8x8xf32>
    tpu.vector_store %arg5[%c0_52, %c32, %c0_53], %210 {strides = array<i32>} : memref<2x64x8xf32, #tpu.memory_space<vmem>>, vector<2x8x8xf32>,
    %c5 = arith.constant 5 : index
    %c0_54 = arith.constant 0 : index
    %212 = memref.load %arg4[%c5, %c0_54] : memref<8x4xf32, #tpu.memory_space<smem>>
    %213 = vector.extract_strided_slice %111 {offsets = [0, 0, 0], sizes = [2, 8, 8], strides = [1, 1, 1]} : vector<2x32x8xf32> to vector<2x8x8xf32>
    %214 = vector.broadcast %212 : f32 to vector<2x8x8xf32>
    %215 = arith.mulf %214, %213 : vector<2x8x8xf32>
    %c5_55 = arith.constant 5 : index
    %c1_56 = arith.constant 1 : index
    %216 = memref.load %arg4[%c5_55, %c1_56] : memref<8x4xf32, #tpu.memory_space<smem>>
    %217 = vector.extract_strided_slice %111 {offsets = [0, 8, 0], sizes = [2, 8, 8], strides = [1, 1, 1]} : vector<2x32x8xf32> to vector<2x8x8xf32>
    %218 = vector.broadcast %216 : f32 to vector<2x8x8xf32>
    %219 = arith.mulf %218, %217 : vector<2x8x8xf32>
    %220 = arith.addf %215, %219 : vector<2x8x8xf32>
    %c5_57 = arith.constant 5 : index
    %c2_58 = arith.constant 2 : index
    %221 = memref.load %arg4[%c5_57, %c2_58] : memref<8x4xf32, #tpu.memory_space<smem>>
    %222 = vector.extract_strided_slice %111 {offsets = [0, 16, 0], sizes = [2, 8, 8], strides = [1, 1, 1]} : vector<2x32x8xf32> to vector<2x8x8xf32>
    %223 = vector.broadcast %221 : f32 to vector<2x8x8xf32>
    %224 = arith.mulf %223, %222 : vector<2x8x8xf32>
    %225 = arith.addf %220, %224 : vector<2x8x8xf32>
    %c5_59 = arith.constant 5 : index
    %c3_60 = arith.constant 3 : index
    %226 = memref.load %arg4[%c5_59, %c3_60] : memref<8x4xf32, #tpu.memory_space<smem>>
    %227 = vector.extract_strided_slice %111 {offsets = [0, 24, 0], sizes = [2, 8, 8], strides = [1, 1, 1]} : vector<2x32x8xf32> to vector<2x8x8xf32>
    %228 = vector.broadcast %226 : f32 to vector<2x8x8xf32>
    %229 = arith.mulf %228, %227 : vector<2x8x8xf32>
    %230 = arith.addf %225, %229 : vector<2x8x8xf32>
    %c0_61 = arith.constant 0 : index
    %c40 = arith.constant 40 : index
    %c0_62 = arith.constant 0 : index
    %231 = vector.load %arg5[%c0_61, %c40, %c0_62] : memref<2x64x8xf32, #tpu.memory_space<vmem>>, vector<2x8x8xf32>
    tpu.vector_store %arg5[%c0_61, %c40, %c0_62], %230 {strides = array<i32>} : memref<2x64x8xf32, #tpu.memory_space<vmem>>, vector<2x8x8xf32>,
    %c6 = arith.constant 6 : index
    %c0_63 = arith.constant 0 : index
    %232 = memref.load %arg4[%c6, %c0_63] : memref<8x4xf32, #tpu.memory_space<smem>>
    %233 = vector.extract_strided_slice %111 {offsets = [0, 0, 0], sizes = [2, 8, 8], strides = [1, 1, 1]} : vector<2x32x8xf32> to vector<2x8x8xf32>
    %234 = vector.broadcast %232 : f32 to vector<2x8x8xf32>
    %235 = arith.mulf %234, %233 : vector<2x8x8xf32>
    %c6_64 = arith.constant 6 : index
    %c1_65 = arith.constant 1 : index
    %236 = memref.load %arg4[%c6_64, %c1_65] : memref<8x4xf32, #tpu.memory_space<smem>>
    %237 = vector.extract_strided_slice %111 {offsets = [0, 8, 0], sizes = [2, 8, 8], strides = [1, 1, 1]} : vector<2x32x8xf32> to vector<2x8x8xf32>
    %238 = vector.broadcast %236 : f32 to vector<2x8x8xf32>
    %239 = arith.mulf %238, %237 : vector<2x8x8xf32>
    %240 = arith.addf %235, %239 : vector<2x8x8xf32>
    %c6_66 = arith.constant 6 : index
    %c2_67 = arith.constant 2 : index
    %241 = memref.load %arg4[%c6_66, %c2_67] : memref<8x4xf32, #tpu.memory_space<smem>>
    %242 = vector.extract_strided_slice %111 {offsets = [0, 16, 0], sizes = [2, 8, 8], strides = [1, 1, 1]} : vector<2x32x8xf32> to vector<2x8x8xf32>
    %243 = vector.broadcast %241 : f32 to vector<2x8x8xf32>
    %244 = arith.mulf %243, %242 : vector<2x8x8xf32>
    %245 = arith.addf %240, %244 : vector<2x8x8xf32>
    %c6_68 = arith.constant 6 : index
    %c3_69 = arith.constant 3 : index
    %246 = memref.load %arg4[%c6_68, %c3_69] : memref<8x4xf32, #tpu.memory_space<smem>>
    %247 = vector.extract_strided_slice %111 {offsets = [0, 24, 0], sizes = [2, 8, 8], strides = [1, 1, 1]} : vector<2x32x8xf32> to vector<2x8x8xf32>
    %248 = vector.broadcast %246 : f32 to vector<2x8x8xf32>
    %249 = arith.mulf %248, %247 : vector<2x8x8xf32>
    %250 = arith.addf %245, %249 : vector<2x8x8xf32>
    %c0_70 = arith.constant 0 : index
    %c48 = arith.constant 48 : index
    %c0_71 = arith.constant 0 : index
    %251 = vector.load %arg5[%c0_70, %c48, %c0_71] : memref<2x64x8xf32, #tpu.memory_space<vmem>>, vector<2x8x8xf32>
    tpu.vector_store %arg5[%c0_70, %c48, %c0_71], %250 {strides = array<i32>} : memref<2x64x8xf32, #tpu.memory_space<vmem>>, vector<2x8x8xf32>,
    %c7 = arith.constant 7 : index
    %c0_72 = arith.constant 0 : index
    %252 = memref.load %arg4[%c7, %c0_72] : memref<8x4xf32, #tpu.memory_space<smem>>
    %253 = vector.extract_strided_slice %111 {offsets = [0, 0, 0], sizes = [2, 8, 8], strides = [1, 1, 1]} : vector<2x32x8xf32> to vector<2x8x8xf32>
    %254 = vector.broadcast %252 : f32 to vector<2x8x8xf32>
    %255 = arith.mulf %254, %253 : vector<2x8x8xf32>
    %c7_73 = arith.constant 7 : index
    %c1_74 = arith.constant 1 : index
    %256 = memref.load %arg4[%c7_73, %c1_74] : memref<8x4xf32, #tpu.memory_space<smem>>
    %257 = vector.extract_strided_slice %111 {offsets = [0, 8, 0], sizes = [2, 8, 8], strides = [1, 1, 1]} : vector<2x32x8xf32> to vector<2x8x8xf32>
    %258 = vector.broadcast %256 : f32 to vector<2x8x8xf32>
    %259 = arith.mulf %258, %257 : vector<2x8x8xf32>
    %260 = arith.addf %255, %259 : vector<2x8x8xf32>
    %c7_75 = arith.constant 7 : index
    %c2_76 = arith.constant 2 : index
    %261 = memref.load %arg4[%c7_75, %c2_76] : memref<8x4xf32, #tpu.memory_space<smem>>
    %262 = vector.extract_strided_slice %111 {offsets = [0, 16, 0], sizes = [2, 8, 8], strides = [1, 1, 1]} : vector<2x32x8xf32> to vector<2x8x8xf32>
    %263 = vector.broadcast %261 : f32 to vector<2x8x8xf32>
    %264 = arith.mulf %263, %262 : vector<2x8x8xf32>
    %265 = arith.addf %260, %264 : vector<2x8x8xf32>
    %c7_77 = arith.constant 7 : index
    %c3_78 = arith.constant 3 : index
    %266 = memref.load %arg4[%c7_77, %c3_78] : memref<8x4xf32, #tpu.memory_space<smem>>
    %267 = vector.extract_strided_slice %111 {offsets = [0, 24, 0], sizes = [2, 8, 8], strides = [1, 1, 1]} : vector<2x32x8xf32> to vector<2x8x8xf32>
    %268 = vector.broadcast %266 : f32 to vector<2x8x8xf32>
    %269 = arith.mulf %268, %267 : vector<2x8x8xf32>
    %270 = arith.addf %265, %269 : vector<2x8x8xf32>
    %c0_79 = arith.constant 0 : index
    %c56 = arith.constant 56 : index
    %c0_80 = arith.constant 0 : index
    %271 = vector.load %arg5[%c0_79, %c56, %c0_80] : memref<2x64x8xf32, #tpu.memory_space<vmem>>, vector<2x8x8xf32>
    tpu.vector_store %arg5[%c0_79, %c56, %c0_80], %270 {strides = array<i32>} : memref<2x64x8xf32, #tpu.memory_space<vmem>>, vector<2x8x8xf32>,
    return
  }
  func.func @transform_0(%arg0: i32) -> (i32, i32, i32) {
    %c0_i32 = arith.constant 0 : i32
    %c0_i32_0 = arith.constant 0 : i32
    %c0_i32_1 = arith.constant 0 : i32
    return %arg0, %c0_i32, %c0_i32_0 : i32, i32, i32
  }
  func.func @transform_1(%arg0: i32) -> (i32, i32) {
    %c0_i32 = arith.constant 0 : i32
    %c0_i32_0 = arith.constant 0 : i32
    %c0_i32_1 = arith.constant 0 : i32
    return %c0_i32, %c0_i32_0 : i32, i32
  }
  func.func @transform_2(%arg0: i32) -> (i32, i32) {
    %c0_i32 = arith.constant 0 : i32
    %c0_i32_0 = arith.constant 0 : i32
    %c0_i32_1 = arith.constant 0 : i32
    return %c0_i32, %c0_i32_0 : i32, i32
  }
  func.func @transform_3(%arg0: i32) -> (i32, i32) {
    %c0_i32 = arith.constant 0 : i32
    %c0_i32_0 = arith.constant 0 : i32
    %c0_i32_1 = arith.constant 0 : i32
    return %c0_i32, %c0_i32_0 : i32, i32
  }
  func.func @transform_4(%arg0: i32) -> (i32, i32, i32) {
    %c0_i32 = arith.constant 0 : i32
    %c0_i32_0 = arith.constant 0 : i32
    %c0_i32_1 = arith.constant 0 : i32
    return %arg0, %c0_i32, %c0_i32_0 : i32, i32, i32
  }
}

</mosaic_0001>

<llo_original>
// kernel: tpu_custom_call.1
$region0: #{tpu_custom_call.1}
  #allocation0 [shape = 'u32[]', space=smem, size = 0x4, offset = 0x4, fixed_abs, tag = 'smem constant byte address 0x4 - core index']
  #allocation1 [shape = 'u32[72,128]{1,0:T(1,128)}', space=vmem, size = 0x9000, scoped, tag = 'internal scratch']
  %s0 = inlined_call_operand.vmem [shape: f32[2,32,32], index: 0, kind: input, shape index: {}]
  %s1 = inlined_call_operand.vmem [shape: f32[32,1], index: 1, kind: input, shape index: {}]
  %s2 = inlined_call_operand.vmem [shape: f32[32,1], index: 2, kind: input, shape index: {}]
  %s3 = inlined_call_operand.vmem [shape: f32[8,4], index: 3, kind: input, shape index: {}]
  %s4 = inlined_call_operand.vmem [shape: f32[2,64,8], index: 4, kind: output, shape index: {}]
  %s5 = sld [smem:[#allocation0]]
  $region30: #{tpu_custom_call.1} parent=0
    _
  %s7 = ssub.s32 1, %s5
  %s8 = scalar_select 0, %s7, %s5
  $region1: #{tpu_custom_call.1} parent=0
    #allocation2 [shape = 'u8[4096]{0}', space=smem, size = 0x1000, scoped, tag = 'input window, operand 3, single buffered']
    #allocation3 [shape = 's32[1]{0}', space=sflag, size = 0x4, scoped, tag = 'scoped memory for tpu_custom_call.1']
    %9 = vsyncpa [#allocation3], 0
    // Predicated region
    $region2: #{tpu_custom_call.1} parent=1 // pred_check
      _
    $region3: #{tpu_custom_call.1} parent=1 // pred_check_branch
      %11 = sbr.rel (0) target = $region5
    $region4: #{tpu_custom_call.1} parent=1 // pred_region
      _
    $region5: #{tpu_custom_call.1} parent=1 // pred_fallthru
      _
    // Predicated region
    $region6: #{tpu_custom_call.1} parent=1 // pred_check
      _
    $region7: #{tpu_custom_call.1} parent=1 // pred_check_branch
      %13 = sbr.rel (0) target = $region9
    $region8: #{tpu_custom_call.1} parent=1 // pred_region
      _
    $region9: #{tpu_custom_call.1} parent=1 // pred_fallthru
      _
    // Predicated region
    $region10: #{tpu_custom_call.1} parent=1 // pred_check
      _
    $region11: #{tpu_custom_call.1} parent=1 // pred_check_branch
      %15 = sbr.rel (0) target = $region13
    $region12: #{tpu_custom_call.1} parent=1 // pred_region
      _
    $region13: #{tpu_custom_call.1} parent=1 // pred_fallthru
      _
    // Predicated region
    $region14: #{tpu_custom_call.1} parent=1 // pred_check
      _
    $region15: #{tpu_custom_call.1} parent=1 // pred_check_branch
      %17 = sbr.rel (0) target = $region17
    $region16: #{tpu_custom_call.1} parent=1 // pred_region
      %19 = vsyncadd [#allocation3], 0
      %s21 = sshll.u32 %s3, 4
      %s22 = int_to_ptr.vmem [resolvable:$true] %s21
      %24 = dma.vmem_to_smem %s22, 128, [#allocation2], [#allocation3]
    $region17: #{tpu_custom_call.1} parent=1 // pred_fallthru
      _
    // Predicated region
    $region18: #{tpu_custom_call.1} parent=1 // pred_check
      _
    $region19: #{tpu_custom_call.1} parent=1 // pred_check_branch
      %26 = sbr.rel (0) target = $region21
    $region20: #{tpu_custom_call.1} parent=1 // pred_region
      %28 = dma.done [#allocation3], 128
    $region21: #{tpu_custom_call.1} parent=1 // pred_fallthru
      _
    %29 = sfence
    %v30 = vld [vmem:[%s0] sm:$0xff]
    %v31 = vld [vmem:[%s0 + $0x8] sm:$0xff]
    %v32 = vld [vmem:[%s0 + $0x10] sm:$0xff]
    %v33 = vld [vmem:[%s0 + $0x18] sm:$0xff]
    %v34 = vld [vmem:[%s0 + $0x20] sm:$0xff]
    %v35 = vld [vmem:[%s0 + $0x28] sm:$0xff]
    %v36 = vld [vmem:[%s0 + $0x30] sm:$0xff]
    %v37 = vld [vmem:[%s0 + $0x38] sm:$0xff]
    %v38 = vld [vmem:[%s1] sm:$0xff]
    %v39 = vld [vmem:[%s1 + $0x8] sm:$0xff]
    %v40 = vld [vmem:[%s1 + $0x10] sm:$0xff]
    %v41 = vld [vmem:[%s1 + $0x18] sm:$0xff]
    %43 = vset.pattern.permute.xlu0 0
    %44 = vperm.xlu0 %43, %v38
    %v45 = vpop.permute.xlu0 %44
    %48 = vset.pattern.permute.xlu0 0
    %49 = vperm.xlu0 %48, %v39
    %v50 = vpop.permute.xlu0 %49
    %53 = vset.pattern.permute.xlu0 0
    %54 = vperm.xlu0 %53, %v40
    %v55 = vpop.permute.xlu0 %54
    %58 = vset.pattern.permute.xlu0 0
    %59 = vperm.xlu0 %58, %v41
    %v60 = vpop.permute.xlu0 %59
    %v62 = vmul.f32 %v30, %v45
    %v63 = vmul.f32 %v31, %v50
    %v64 = vmul.f32 %v32, %v55
    %v65 = vmul.f32 %v33, %v60
    %v66 = vmul.f32 %v34, %v45
    %v67 = vmul.f32 %v35, %v50
    %v68 = vmul.f32 %v36, %v55
    %v69 = vmul.f32 %v37, %v60
    %v70 = vld [vmem:[%s2] sm:$0xff]
    %v71 = vld [vmem:[%s2 + $0x8] sm:$0xff]
    %v72 = vld [vmem:[%s2 + $0x10] sm:$0xff]
    %v73 = vld [vmem:[%s2 + $0x18] sm:$0xff]
    %75 = vset.pattern.permute.xlu0 0
    %76 = vperm.xlu0 %75, %v70
    %v77 = vpop.permute.xlu0 %76
    %80 = vset.pattern.permute.xlu0 0
    %81 = vperm.xlu0 %80, %v71
    %v82 = vpop.permute.xlu0 %81
    %85 = vset.pattern.permute.xlu0 0
    %86 = vperm.xlu0 %85, %v72
    %v87 = vpop.permute.xlu0 %86
    %90 = vset.pattern.permute.xlu0 0
    %91 = vperm.xlu0 %90, %v73
    %v92 = vpop.permute.xlu0 %91
    %v94 = vadd.f32 %v62, %v77
    %v95 = vadd.f32 %v63, %v82
    %v96 = vadd.f32 %v64, %v87
    %v97 = vadd.f32 %v65, %v92
    %v98 = vadd.f32 %v66, %v77
    %v99 = vadd.f32 %v67, %v82
    %v100 = vadd.f32 %v68, %v87
    %v101 = vadd.f32 %v69, %v92
    %v102 = vmax.f32 %v94, 0.0
    %v103 = vmax.f32 %v95, 0.0
    %v104 = vmax.f32 %v96, 0.0
    %v105 = vmax.f32 %v97, 0.0
    %v106 = vmax.f32 %v98, 0.0
    %v107 = vmax.f32 %v99, 0.0
    %v108 = vmax.f32 %v100, 0.0
    %v109 = vmax.f32 %v101, 0.0
    %118 = vrot.lane.b32.xlu0 %v102, 112
    %v119 = vpop.permute.xlu0 %118
    %120 = vrot.lane.b32.xlu0 %v103, 112
    %v121 = vpop.permute.xlu0 %120
    %122 = vrot.lane.b32.xlu0 %v104, 112
    %v123 = vpop.permute.xlu0 %122
    %124 = vrot.lane.b32.xlu0 %v105, 112
    %v125 = vpop.permute.xlu0 %124
    %126 = vrot.lane.b32.xlu0 %v106, 112
    %v127 = vpop.permute.xlu0 %126
    %128 = vrot.lane.b32.xlu0 %v107, 112
    %v129 = vpop.permute.xlu0 %128
    %130 = vrot.lane.b32.xlu0 %v108, 112
    %v131 = vpop.permute.xlu0 %130
    %132 = vrot.lane.b32.xlu0 %v109, 112
    %v133 = vpop.permute.xlu0 %132
    %v142 = vadd.f32 %v102, %v119
    %v143 = vadd.f32 %v103, %v121
    %v144 = vadd.f32 %v104, %v123
    %v145 = vadd.f32 %v105, %v125
    %v146 = vadd.f32 %v106, %v127
    %v147 = vadd.f32 %v107, %v129
    %v148 = vadd.f32 %v108, %v131
    %v149 = vadd.f32 %v109, %v133
    %v150 = vlaneseq
    %v151 = vand.u32 %v150, 127
    %160 = vrot.lane.b32.xlu0 %v142, 127
    %v161 = vpop.permute.xlu0 %160
    %162 = vrot.lane.b32.xlu0 %v143, 127
    %v163 = vpop.permute.xlu0 %162
    %164 = vrot.lane.b32.xlu0 %v144, 127
    %v165 = vpop.permute.xlu0 %164
    %166 = vrot.lane.b32.xlu0 %v145, 127
    %v167 = vpop.permute.xlu0 %166
    %168 = vrot.lane.b32.xlu0 %v146, 127
    %v169 = vpop.permute.xlu0 %168
    %170 = vrot.lane.b32.xlu0 %v147, 127
    %v171 = vpop.permute.xlu0 %170
    %172 = vrot.lane.b32.xlu0 %v148, 127
    %v173 = vpop.permute.xlu0 %172
    %174 = vrot.lane.b32.xlu0 %v149, 127
    %v175 = vpop.permute.xlu0 %174
    %v184 = vadd.f32 %v142, %v161
    %v185 = vadd.f32 %v143, %v163
    %v186 = vadd.f32 %v144, %v165
    %v187 = vadd.f32 %v145, %v167
    %v188 = vadd.f32 %v146, %v169
    %v189 = vadd.f32 %v147, %v171
    %v190 = vadd.f32 %v148, %v173
    %v191 = vadd.f32 %v149, %v175
    %vm192 = vcmp.eq.s32.totalorder %v151, 0
    %v193 = vsel %vm192, 1, 0
    %v194 = vcvt.s32.f32 %v193
    %196 = vset.pattern.permute.xlu0 0
    %197 = vperm.xlu0 %196, %v184
    %v198 = vpop.permute.xlu0 %197
    %201 = vset.pattern.permute.xlu0 0
    %202 = vperm.xlu0 %201, %v185
    %v203 = vpop.permute.xlu0 %202
    %206 = vset.pattern.permute.xlu0 0
    %207 = vperm.xlu0 %206, %v186
    %v208 = vpop.permute.xlu0 %207
    %211 = vset.pattern.permute.xlu0 0
    %212 = vperm.xlu0 %211, %v187
    %v213 = vpop.permute.xlu0 %212
    %216 = vset.pattern.permute.xlu0 0
    %217 = vperm.xlu0 %216, %v188
    %v218 = vpop.permute.xlu0 %217
    %221 = vset.pattern.permute.xlu0 0
    %222 = vperm.xlu0 %221, %v189
    %v223 = vpop.permute.xlu0 %222
    %226 = vset.pattern.permute.xlu0 0
    %227 = vperm.xlu0 %226, %v190
    %v228 = vpop.permute.xlu0 %227
    %231 = vset.pattern.permute.xlu0 0
    %232 = vperm.xlu0 %231, %v191
    %v233 = vpop.permute.xlu0 %232
    %v235 = vmul.f32 %v198, %v194
    %v236 = vmul.f32 %v203, %v194
    %v237 = vmul.f32 %v208, %v194
    %v238 = vmul.f32 %v213, %v194
    %v239 = vmul.f32 %v218, %v194
    %v240 = vmul.f32 %v223, %v194
    %v241 = vmul.f32 %v228, %v194
    %v242 = vmul.f32 %v233, %v194
    %v243 = vadd.f32 %v235, 0.0
    %v244 = vadd.f32 %v236, 0.0
    %v245 = vadd.f32 %v237, 0.0
    %v246 = vadd.f32 %v238, 0.0
    %v247 = vadd.f32 %v239, 0.0
    %v248 = vadd.f32 %v240, 0.0
    %v249 = vadd.f32 %v241, 0.0
    %v250 = vadd.f32 %v242, 0.0
    %vm251 = vcmp.eq.s32.totalorder %v151, 1
    %v252 = vsel %vm251, 1, 0
    %v253 = vcvt.s32.f32 %v252
    %254 = vset.pattern.permute.xlu0 2
    %255 = vperm.xlu0 %254, %v184
    %v256 = vpop.permute.xlu0 %255
    %258 = vset.pattern.permute.xlu0 2
    %259 = vperm.xlu0 %258, %v185
    %v260 = vpop.permute.xlu0 %259
    %262 = vset.pattern.permute.xlu0 2
    %263 = vperm.xlu0 %262, %v186
    %v264 = vpop.permute.xlu0 %263
    %266 = vset.pattern.permute.xlu0 2
    %267 = vperm.xlu0 %266, %v187
    %v268 = vpop.permute.xlu0 %267
    %270 = vset.pattern.permute.xlu0 2
    %271 = vperm.xlu0 %270, %v188
    %v272 = vpop.permute.xlu0 %271
    %274 = vset.pattern.permute.xlu0 2
    %275 = vperm.xlu0 %274, %v189
    %v276 = vpop.permute.xlu0 %275
    %278 = vset.pattern.permute.xlu0 2
    %279 = vperm.xlu0 %278, %v190
    %v280 = vpop.permute.xlu0 %279
    %282 = vset.pattern.permute.xlu0 2
    %283 = vperm.xlu0 %282, %v191
    %v284 = vpop.permute.xlu0 %283
    %v286 = vmul.f32 %v256, %v253
    %v287 = vmul.f32 %v260, %v253
    %v288 = vmul.f32 %v264, %v253
    %v289 = vmul.f32 %v268, %v253
    %v290 = vmul.f32 %v272, %v253
    %v291 = vmul.f32 %v276, %v253
    %v292 = vmul.f32 %v280, %v253
    %v293 = vmul.f32 %v284, %v253
    %v294 = vadd.f32 %v243, %v286
    %v295 = vadd.f32 %v244, %v287
    %v296 = vadd.f32 %v245, %v288
    %v297 = vadd.f32 %v246, %v289
    %v298 = vadd.f32 %v247, %v290
    %v299 = vadd.f32 %v248, %v291
    %v300 = vadd.f32 %v249, %v292
    %v301 = vadd.f32 %v250, %v293
    %vm302 = vcmp.eq.s32.totalorder %v151, 2
    %v303 = vsel %vm302, 1, 0
    %v304 = vcvt.s32.f32 %v303
    %305 = vset.pattern.permute.xlu0 4
    %306 = vperm.xlu0 %305, %v184
    %v307 = vpop.permute.xlu0 %306
    %309 = vset.pattern.permute.xlu0 4
    %310 = vperm.xlu0 %309, %v185
    %v311 = vpop.permute.xlu0 %310
    %313 = vset.pattern.permute.xlu0 4
    %314 = vperm.xlu0 %313, %v186
    %v315 = vpop.permute.xlu0 %314
    %317 = vset.pattern.permute.xlu0 4
    %318 = vperm.xlu0 %317, %v187
    %v319 = vpop.permute.xlu0 %318
    %321 = vset.pattern.permute.xlu0 4
    %322 = vperm.xlu0 %321, %v188
    %v323 = vpop.permute.xlu0 %322
    %325 = vset.pattern.permute.xlu0 4
    %326 = vperm.xlu0 %325, %v189
    %v327 = vpop.permute.xlu0 %326
    %329 = vset.pattern.permute.xlu0 4
    %330 = vperm.xlu0 %329, %v190
    %v331 = vpop.permute.xlu0 %330
    %333 = vset.pattern.permute.xlu0 4
    %334 = vperm.xlu0 %333, %v191
    %v335 = vpop.permute.xlu0 %334
    %v337 = vmul.f32 %v307, %v304
    %v338 = vmul.f32 %v311, %v304
    %v339 = vmul.f32 %v315, %v304
    %v340 = vmul.f32 %v319, %v304
    %v341 = vmul.f32 %v323, %v304
    %v342 = vmul.f32 %v327, %v304
    %v343 = vmul.f32 %v331, %v304
    %v344 = vmul.f32 %v335, %v304
    %v345 = vadd.f32 %v294, %v337
    %v346 = vadd.f32 %v295, %v338
    %v347 = vadd.f32 %v296, %v339
    %v348 = vadd.f32 %v297, %v340
    %v349 = vadd.f32 %v298, %v341
    %v350 = vadd.f32 %v299, %v342
    %v351 = vadd.f32 %v300, %v343
    %v352 = vadd.f32 %v301, %v344
    %vm353 = vcmp.eq.s32.totalorder %v151, 3
    %v354 = vsel %vm353, 1, 0
    %v355 = vcvt.s32.f32 %v354
    %356 = vset.pattern.permute.xlu0 6
    %357 = vperm.xlu0 %356, %v184
    %v358 = vpop.permute.xlu0 %357
    %360 = vset.pattern.permute.xlu0 6
    %361 = vperm.xlu0 %360, %v185
    %v362 = vpop.permute.xlu0 %361
    %364 = vset.pattern.permute.xlu0 6
    %365 = vperm.xlu0 %364, %v186
    %v366 = vpop.permute.xlu0 %365
    %368 = vset.pattern.permute.xlu0 6
    %369 = vperm.xlu0 %368, %v187
    %v370 = vpop.permute.xlu0 %369
    %372 = vset.pattern.permute.xlu0 6
    %373 = vperm.xlu0 %372, %v188
    %v374 = vpop.permute.xlu0 %373
    %376 = vset.pattern.permute.xlu0 6
    %377 = vperm.xlu0 %376, %v189
    %v378 = vpop.permute.xlu0 %377
    %380 = vset.pattern.permute.xlu0 6
    %381 = vperm.xlu0 %380, %v190
    %v382 = vpop.permute.xlu0 %381
    %384 = vset.pattern.permute.xlu0 6
    %385 = vperm.xlu0 %384, %v191
    %v386 = vpop.permute.xlu0 %385
    %v388 = vmul.f32 %v358, %v355
    %v389 = vmul.f32 %v362, %v355
    %v390 = vmul.f32 %v366, %v355
    %v391 = vmul.f32 %v370, %v355
    %v392 = vmul.f32 %v374, %v355
    %v393 = vmul.f32 %v378, %v355
    %v394 = vmul.f32 %v382, %v355
    %v395 = vmul.f32 %v386, %v355
    %v396 = vadd.f32 %v345, %v388
    %v397 = vadd.f32 %v346, %v389
    %v398 = vadd.f32 %v347, %v390
    %v399 = vadd.f32 %v348, %v391
    %v400 = vadd.f32 %v349, %v392
    %v401 = vadd.f32 %v350, %v393
    %v402 = vadd.f32 %v351, %v394
    %v403 = vadd.f32 %v352, %v395
    %vm404 = vcmp.eq.s32.totalorder %v151, 4
    %v405 = vsel %vm404, 1, 0
    %v406 = vcvt.s32.f32 %v405
    %407 = vset.pattern.permute.xlu0 8
    %408 = vperm.xlu0 %407, %v184
    %v409 = vpop.permute.xlu0 %408
    %411 = vset.pattern.permute.xlu0 8
    %412 = vperm.xlu0 %411, %v185
    %v413 = vpop.permute.xlu0 %412
    %415 = vset.pattern.permute.xlu0 8
    %416 = vperm.xlu0 %415, %v186
    %v417 = vpop.permute.xlu0 %416
    %419 = vset.pattern.permute.xlu0 8
    %420 = vperm.xlu0 %419, %v187
    %v421 = vpop.permute.xlu0 %420
    %423 = vset.pattern.permute.xlu0 8
    %424 = vperm.xlu0 %423, %v188
    %v425 = vpop.permute.xlu0 %424
    %427 = vset.pattern.permute.xlu0 8
    %428 = vperm.xlu0 %427, %v189
    %v429 = vpop.permute.xlu0 %428
    %431 = vset.pattern.permute.xlu0 8
    %432 = vperm.xlu0 %431, %v190
    %v433 = vpop.permute.xlu0 %432
    %435 = vset.pattern.permute.xlu0 8
    %436 = vperm.xlu0 %435, %v191
    %v437 = vpop.permute.xlu0 %436
    %v439 = vmul.f32 %v409, %v406
    %v440 = vmul.f32 %v413, %v406
    %v441 = vmul.f32 %v417, %v406
    %v442 = vmul.f32 %v421, %v406
    %v443 = vmul.f32 %v425, %v406
    %v444 = vmul.f32 %v429, %v406
    %v445 = vmul.f32 %v433, %v406
    %v446 = vmul.f32 %v437, %v406
    %v447 = vadd.f32 %v396, %v439
    %v448 = vadd.f32 %v397, %v440
    %v449 = vadd.f32 %v398, %v441
    %v450 = vadd.f32 %v399, %v442
    %v451 = vadd.f32 %v400, %v443
    %v452 = vadd.f32 %v401, %v444
    %v453 = vadd.f32 %v402, %v445
    %v454 = vadd.f32 %v403, %v446
    %vm455 = vcmp.eq.s32.totalorder %v151, 5
    %v456 = vsel %vm455, 1, 0
    %v457 = vcvt.s32.f32 %v456
    %458 = vset.pattern.permute.xlu0 10
    %459 = vperm.xlu0 %458, %v184
    %v460 = vpop.permute.xlu0 %459
    %462 = vset.pattern.permute.xlu0 10
    %463 = vperm.xlu0 %462, %v185
    %v464 = vpop.permute.xlu0 %463
    %466 = vset.pattern.permute.xlu0 10
    %467 = vperm.xlu0 %466, %v186
    %v468 = vpop.permute.xlu0 %467
    %470 = vset.pattern.permute.xlu0 10
    %471 = vperm.xlu0 %470, %v187
    %v472 = vpop.permute.xlu0 %471
    %474 = vset.pattern.permute.xlu0 10
    %475 = vperm.xlu0 %474, %v188
    %v476 = vpop.permute.xlu0 %475
    %478 = vset.pattern.permute.xlu0 10
    %479 = vperm.xlu0 %478, %v189
    %v480 = vpop.permute.xlu0 %479
    %482 = vset.pattern.permute.xlu0 10
    %483 = vperm.xlu0 %482, %v190
    %v484 = vpop.permute.xlu0 %483
    %486 = vset.pattern.permute.xlu0 10
    %487 = vperm.xlu0 %486, %v191
    %v488 = vpop.permute.xlu0 %487
    %v490 = vmul.f32 %v460, %v457
    %v491 = vmul.f32 %v464, %v457
    %v492 = vmul.f32 %v468, %v457
    %v493 = vmul.f32 %v472, %v457
    %v494 = vmul.f32 %v476, %v457
    %v495 = vmul.f32 %v480, %v457
    %v496 = vmul.f32 %v484, %v457
    %v497 = vmul.f32 %v488, %v457
    %v498 = vadd.f32 %v447, %v490
    %v499 = vadd.f32 %v448, %v491
    %v500 = vadd.f32 %v449, %v492
    %v501 = vadd.f32 %v450, %v493
    %v502 = vadd.f32 %v451, %v494
    %v503 = vadd.f32 %v452, %v495
    %v504 = vadd.f32 %v453, %v496
    %v505 = vadd.f32 %v454, %v497
    %vm506 = vcmp.eq.s32.totalorder %v151, 6
    %v507 = vsel %vm506, 1, 0
    %v508 = vcvt.s32.f32 %v507
    %509 = vset.pattern.permute.xlu0 12
    %510 = vperm.xlu0 %509, %v184
    %v511 = vpop.permute.xlu0 %510
    %513 = vset.pattern.permute.xlu0 12
    %514 = vperm.xlu0 %513, %v185
    %v515 = vpop.permute.xlu0 %514
    %517 = vset.pattern.permute.xlu0 12
    %518 = vperm.xlu0 %517, %v186
    %v519 = vpop.permute.xlu0 %518
    %521 = vset.pattern.permute.xlu0 12
    %522 = vperm.xlu0 %521, %v187
    %v523 = vpop.permute.xlu0 %522
    %525 = vset.pattern.permute.xlu0 12
    %526 = vperm.xlu0 %525, %v188
    %v527 = vpop.permute.xlu0 %526
    %529 = vset.pattern.permute.xlu0 12
    %530 = vperm.xlu0 %529, %v189
    %v531 = vpop.permute.xlu0 %530
    %533 = vset.pattern.permute.xlu0 12
    %534 = vperm.xlu0 %533, %v190
    %v535 = vpop.permute.xlu0 %534
    %537 = vset.pattern.permute.xlu0 12
    %538 = vperm.xlu0 %537, %v191
    %v539 = vpop.permute.xlu0 %538
    %v541 = vmul.f32 %v511, %v508
    %v542 = vmul.f32 %v515, %v508
    %v543 = vmul.f32 %v519, %v508
    %v544 = vmul.f32 %v523, %v508
    %v545 = vmul.f32 %v527, %v508
    %v546 = vmul.f32 %v531, %v508
    %v547 = vmul.f32 %v535, %v508
    %v548 = vmul.f32 %v539, %v508
    %v549 = vadd.f32 %v498, %v541
    %v550 = vadd.f32 %v499, %v542
    %v551 = vadd.f32 %v500, %v543
    %v552 = vadd.f32 %v501, %v544
    %v553 = vadd.f32 %v502, %v545
    %v554 = vadd.f32 %v503, %v546
    %v555 = vadd.f32 %v504, %v547
    %v556 = vadd.f32 %v505, %v548
    %vm557 = vcmp.eq.s32.totalorder %v151, 7
    %v558 = vsel %vm557, 1, 0
    %v559 = vcvt.s32.f32 %v558
    %560 = vset.pattern.permute.xlu0 14
    %561 = vperm.xlu0 %560, %v184
    %v562 = vpop.permute.xlu0 %561
    %564 = vset.pattern.permute.xlu0 14
    %565 = vperm.xlu0 %564, %v185
    %v566 = vpop.permute.xlu0 %565
    %568 = vset.pattern.permute.xlu0 14
    %569 = vperm.xlu0 %568, %v186
    %v570 = vpop.permute.xlu0 %569
    %572 = vset.pattern.permute.xlu0 14
    %573 = vperm.xlu0 %572, %v187
    %v574 = vpop.permute.xlu0 %573
    %576 = vset.pattern.permute.xlu0 14
    %577 = vperm.xlu0 %576, %v188
    %v578 = vpop.permute.xlu0 %577
    %580 = vset.pattern.permute.xlu0 14
    %581 = vperm.xlu0 %580, %v189
    %v582 = vpop.permute.xlu0 %581
    %584 = vset.pattern.permute.xlu0 14
    %585 = vperm.xlu0 %584, %v190
    %v586 = vpop.permute.xlu0 %585
    %588 = vset.pattern.permute.xlu0 14
    %589 = vperm.xlu0 %588, %v191
    %v590 = vpop.permute.xlu0 %589
    %v592 = vmul.f32 %v562, %v559
    %v593 = vmul.f32 %v566, %v559
    %v594 = vmul.f32 %v570, %v559
    %v595 = vmul.f32 %v574, %v559
    %v596 = vmul.f32 %v578, %v559
    %v597 = vmul.f32 %v582, %v559
    %v598 = vmul.f32 %v586, %v559
    %v599 = vmul.f32 %v590, %v559
    %v600 = vadd.f32 %v549, %v592
    %v601 = vadd.f32 %v550, %v593
    %v602 = vadd.f32 %v551, %v594
    %v603 = vadd.f32 %v552, %v595
    %v604 = vadd.f32 %v553, %v596
    %v605 = vadd.f32 %v554, %v597
    %v606 = vadd.f32 %v555, %v598
    %v607 = vadd.f32 %v556, %v599
    %s608 = sld [smem:[#allocation2]]
    %v609 = vstv %s608
    %v610 = vmul.f32 %v609, %v600
    %v611 = vmul.f32 %v609, %v604
    %s612 = sld [smem:[#allocation2 + $0x1]]
    %v613 = vstv %s612
    %v614 = vmul.f32 %v613, %v601
    %v615 = vmul.f32 %v613, %v605
    %v616 = vadd.f32 %v610, %v614
    %v617 = vadd.f32 %v611, %v615
    %s618 = sld [smem:[#allocation2 + $0x2]]
    %v619 = vstv %s618
    %v620 = vmul.f32 %v619, %v602
    %v621 = vmul.f32 %v619, %v606
    %v622 = vadd.f32 %v616, %v620
    %v623 = vadd.f32 %v617, %v621
    %s624 = sld [smem:[#allocation2 + $0x3]]
    %v625 = vstv %s624
    %v626 = vmul.f32 %v625, %v603
    %v627 = vmul.f32 %v625, %v607
    %v628 = vadd.f32 %v622, %v626
    %v629 = vadd.f32 %v623, %v627
    %vm630 = vcmask 64512
    %631 = vst.msk [vmem:[%s4] sm:$0xff] %vm630, %v628
    %632 = vst.msk [vmem:[%s4 + $0x40] sm:$0xff] %vm630, %v629
    %s633 = sld [smem:[#allocation2 + $0x80]]
    %v634 = vstv %s633
    %v635 = vmul.f32 %v634, %v600
    %v636 = vmul.f32 %v634, %v604
    %s637 = sld [smem:[#allocation2 + $0x81]]
    %v638 = vstv %s637
    %v639 = vmul.f32 %v638, %v601
    %v640 = vmul.f32 %v638, %v605
    %v641 = vadd.f32 %v635, %v639
    %v642 = vadd.f32 %v636, %v640
    %s643 = sld [smem:[#allocation2 + $0x82]]
    %v644 = vstv %s643
    %v645 = vmul.f32 %v644, %v602
    %v646 = vmul.f32 %v644, %v606
    %v647 = vadd.f32 %v641, %v645
    %v648 = vadd.f32 %v642, %v646
    %s649 = sld [smem:[#allocation2 + $0x83]]
    %v650 = vstv %s649
    %v651 = vmul.f32 %v650, %v603
    %v652 = vmul.f32 %v650, %v607
    %v653 = vadd.f32 %v647, %v651
    %v654 = vadd.f32 %v648, %v652
    %655 = vst.msk [vmem:[%s4 + $0x8] sm:$0xff] %vm630, %v653
    %656 = vst.msk [vmem:[%s4 + $0x48] sm:$0xff] %vm630, %v654
    %s657 = sld [smem:[#allocation2 + $0x100]]
    %v658 = vstv %s657
    %v659 = vmul.f32 %v658, %v600
    %v660 = vmul.f32 %v658, %v604
    %s661 = sld [smem:[#allocation2 + $0x101]]
    %v662 = vstv %s661
    %v663 = vmul.f32 %v662, %v601
    %v664 = vmul.f32 %v662, %v605
    %v665 = vadd.f32 %v659, %v663
    %v666 = vadd.f32 %v660, %v664
    %s667 = sld [smem:[#allocation2 + $0x102]]
    %v668 = vstv %s667
    %v669 = vmul.f32 %v668, %v602
    %v670 = vmul.f32 %v668, %v606
    %v671 = vadd.f32 %v665, %v669
    %v672 = vadd.f32 %v666, %v670
    %s673 = sld [smem:[#allocation2 + $0x103]]
    %v674 = vstv %s673
    %v675 = vmul.f32 %v674, %v603
    %v676 = vmul.f32 %v674, %v607
    %v677 = vadd.f32 %v671, %v675
    %v678 = vadd.f32 %v672, %v676
    %679 = vst.msk [vmem:[%s4 + $0x10] sm:$0xff] %vm630, %v677
    %680 = vst.msk [vmem:[%s4 + $0x50] sm:$0xff] %vm630, %v678
    %s681 = sld [smem:[#allocation2 + $0x180]]
    %v682 = vstv %s681
    %v683 = vmul.f32 %v682, %v600
    %v684 = vmul.f32 %v682, %v604
    %s685 = sld [smem:[#allocation2 + $0x181]]
    %v686 = vstv %s685
    %v687 = vmul.f32 %v686, %v601
    %v688 = vmul.f32 %v686, %v605
    %v689 = vadd.f32 %v683, %v687
    %v690 = vadd.f32 %v684, %v688
    %s691 = sld [smem:[#allocation2 + $0x182]]
    %v692 = vstv %s691
    %v693 = vmul.f32 %v692, %v602
    %v694 = vmul.f32 %v692, %v606
    %v695 = vadd.f32 %v689, %v693
    %v696 = vadd.f32 %v690, %v694
    %s697 = sld [smem:[#allocation2 + $0x183]]
    %v698 = vstv %s697
    %v699 = vmul.f32 %v698, %v603
    %v700 = vmul.f32 %v698, %v607
    %v701 = vadd.f32 %v695, %v699
    %v702 = vadd.f32 %v696, %v700
    %703 = vst.msk [vmem:[%s4 + $0x18] sm:$0xff] %vm630, %v701
    %704 = vst.msk [vmem:[%s4 + $0x58] sm:$0xff] %vm630, %v702
    %s705 = sld [smem:[#allocation2 + $0x200]]
    %v706 = vstv %s705
    %v707 = vmul.f32 %v706, %v600
    %v708 = vmul.f32 %v706, %v604
    %s709 = sld [smem:[#allocation2 + $0x201]]
    %v710 = vstv %s709
    %v711 = vmul.f32 %v710, %v601
    %v712 = vmul.f32 %v710, %v605
    %v713 = vadd.f32 %v707, %v711
    %v714 = vadd.f32 %v708, %v712
    %s715 = sld [smem:[#allocation2 + $0x202]]
    %v716 = vstv %s715
    %v717 = vmul.f32 %v716, %v602
    %v718 = vmul.f32 %v716, %v606
    %v719 = vadd.f32 %v713, %v717
    %v720 = vadd.f32 %v714, %v718
    %s721 = sld [smem:[#allocation2 + $0x203]]
    %v722 = vstv %s721
    %v723 = vmul.f32 %v722, %v603
    %v724 = vmul.f32 %v722, %v607
    %v725 = vadd.f32 %v719, %v723
    %v726 = vadd.f32 %v720, %v724
    %727 = vst.msk [vmem:[%s4 + $0x20] sm:$0xff] %vm630, %v725
    %728 = vst.msk [vmem:[%s4 + $0x60] sm:$0xff] %vm630, %v726
    %s729 = sld [smem:[#allocation2 + $0x280]]
    %v730 = vstv %s729
    %v731 = vmul.f32 %v730, %v600
    %v732 = vmul.f32 %v730, %v604
    %s733 = sld [smem:[#allocation2 + $0x281]]
    %v734 = vstv %s733
    %v735 = vmul.f32 %v734, %v601
    %v736 = vmul.f32 %v734, %v605
    %v737 = vadd.f32 %v731, %v735
    %v738 = vadd.f32 %v732, %v736
    %s739 = sld [smem:[#allocation2 + $0x282]]
    %v740 = vstv %s739
    %v741 = vmul.f32 %v740, %v602
    %v742 = vmul.f32 %v740, %v606
    %v743 = vadd.f32 %v737, %v741
    %v744 = vadd.f32 %v738, %v742
    %s745 = sld [smem:[#allocation2 + $0x283]]
    %v746 = vstv %s745
    %v747 = vmul.f32 %v746, %v603
    %v748 = vmul.f32 %v746, %v607
    %v749 = vadd.f32 %v743, %v747
    %v750 = vadd.f32 %v744, %v748
    %751 = vst.msk [vmem:[%s4 + $0x28] sm:$0xff] %vm630, %v749
    %752 = vst.msk [vmem:[%s4 + $0x68] sm:$0xff] %vm630, %v750
    %s753 = sld [smem:[#allocation2 + $0x300]]
    %v754 = vstv %s753
    %v755 = vmul.f32 %v754, %v600
    %v756 = vmul.f32 %v754, %v604
    %s757 = sld [smem:[#allocation2 + $0x301]]
    %v758 = vstv %s757
    %v759 = vmul.f32 %v758, %v601
    %v760 = vmul.f32 %v758, %v605
    %v761 = vadd.f32 %v755, %v759
    %v762 = vadd.f32 %v756, %v760
    %s763 = sld [smem:[#allocation2 + $0x302]]
    %v764 = vstv %s763
    %v765 = vmul.f32 %v764, %v602
    %v766 = vmul.f32 %v764, %v606
    %v767 = vadd.f32 %v761, %v765
    %v768 = vadd.f32 %v762, %v766
    %s769 = sld [smem:[#allocation2 + $0x303]]
    %v770 = vstv %s769
    %v771 = vmul.f32 %v770, %v603
    %v772 = vmul.f32 %v770, %v607
    %v773 = vadd.f32 %v767, %v771
    %v774 = vadd.f32 %v768, %v772
    %775 = vst.msk [vmem:[%s4 + $0x30] sm:$0xff] %vm630, %v773
    %776 = vst.msk [vmem:[%s4 + $0x70] sm:$0xff] %vm630, %v774
    %s777 = sld [smem:[#allocation2 + $0x380]]
    %v778 = vstv %s777
    %v779 = vmul.f32 %v778, %v600
    %v780 = vmul.f32 %v778, %v604
    %s781 = sld [smem:[#allocation2 + $0x381]]
    %v782 = vstv %s781
    %v783 = vmul.f32 %v782, %v601
    %v784 = vmul.f32 %v782, %v605
    %v785 = vadd.f32 %v779, %v783
    %v786 = vadd.f32 %v780, %v784
    %s787 = sld [smem:[#allocation2 + $0x382]]
    %v788 = vstv %s787
    %v789 = vmul.f32 %v788, %v602
    %v790 = vmul.f32 %v788, %v606
    %v791 = vadd.f32 %v785, %v789
    %v792 = vadd.f32 %v786, %v790
    %s793 = sld [smem:[#allocation2 + $0x383]]
    %v794 = vstv %s793
    %v795 = vmul.f32 %v794, %v603
    %v796 = vmul.f32 %v794, %v607
    %v797 = vadd.f32 %v791, %v795
    %v798 = vadd.f32 %v792, %v796
    %799 = vst.msk [vmem:[%s4 + $0x38] sm:$0xff] %vm630, %v797
    %800 = vst.msk [vmem:[%s4 + $0x78] sm:$0xff] %vm630, %v798
    // Predicated region
    $region22: #{tpu_custom_call.1} parent=1 // pred_check
      _
    $region23: #{tpu_custom_call.1} parent=1 // pred_check_branch
      %802 = sbr.rel (0) target = $region25
    $region24: #{tpu_custom_call.1} parent=1 // pred_region
      _
    $region25: #{tpu_custom_call.1} parent=1 // pred_fallthru
      _
    // Predicated region
    $region26: #{tpu_custom_call.1} parent=1 // pred_check
      _
    $region27: #{tpu_custom_call.1} parent=1 // pred_check_branch
      %804 = sbr.rel (0) target = $region29
    $region28: #{tpu_custom_call.1} parent=1 // pred_region
      _
    $region29: #{tpu_custom_call.1} parent=1 // pred_fallthru
      _
    %805 = vsyncpa [#allocation3], 1

</llo_original>
